<compile_context>
chip_gen: v6e
topology: v6e:2x2x1
jax: 0.10.0
libtpu: 0.0.40
codegen_flags: <defaults>
</compile_context>

<pallas_src>
import functools

import jax
import jax.numpy as jnp
from jax.experimental import pallas as pl
from jax.experimental.pallas import tpu as pltpu


def mhsa_kernel(x_ref, w1_ref, w2_ref, out_ref, attn_ref, *, tile_b, S, n_head):
    """One batch-tile of structured self-attention.

    x_ref    : (tile_b * S, d_in)      flattened batch*seq rows (lane-dense)
    w1_ref   : (d_in, d_hidden)        resident (constant index_map)
    w2_ref   : (d_hidden, n_head)      resident (constant index_map)
    out_ref  : (tile_b * n_head, d_in) lane-dense output slab
    attn_ref : (tile_b * S, n_head)    lane-dense attention slab
    """
    d_in = x_ref.shape[-1]

    x = x_ref[...]                                                # native dtype

    # Fused projection over the whole tile: one MXU pass per matmul.
    # Operands stay in native dtype; accumulation is f32.
    h = jnp.tanh(jnp.dot(x, w1_ref[...],
                         preferred_element_type=jnp.float32))     # (tile_b*S, d_hidden) f32
    logits = jnp.dot(h.astype(x.dtype), w2_ref[...],
                     preferred_element_type=jnp.float32)          # (tile_b*S, n_head) f32

    # TODO(synk): optional attention mask (masked_fill with -inf before softmax)
    # from the PyTorch module is not implemented.

    # Batched softmax over the sequence axis — no per-batch Python loop.
    lg = logits.reshape(tile_b, S, n_head)
    m = jnp.max(lg, axis=1, keepdims=True)                        # (tile_b, 1, n_head)
    e = jnp.exp(lg - m)
    denom = jnp.sum(e, axis=1, keepdims=True)                     # (tile_b, 1, n_head)
    a = e * pl.reciprocal(denom)                                  # exact recip -> EUP slot
    attn_ref[...] = a.reshape(tile_b * S, n_head).astype(attn_ref.dtype)

    # Attention pooling: batched dot_general, contracting S on BOTH operands
    # (transposed-matmul path, no explicit a.T materialization).
    x3 = x.reshape(tile_b, S, d_in)
    out3 = jax.lax.dot_general(
        a.astype(x.dtype), x3,
        dimension_numbers=(((1,), (1,)), ((0,), (0,))),
        preferred_element_type=jnp.float32)                       # (tile_b, n_head, d_in)
    out_ref[...] = out3.reshape(tile_b * n_head, d_in).astype(out_ref.dtype)


def _tile_vmem_bytes(t, S, d_in, d_hidden, n_head, itemsize):
    """Rough VMEM footprint of one batch tile (double-buffered blocks +
    f32 intermediates), used to size tile_b."""
    rows = t * S
    io = 2 * itemsize * (rows * d_in + t * n_head * d_in + rows * n_head)
    weights = 2 * itemsize * (d_in * d_hidden + d_hidden * n_head)
    interm = 4 * rows * (d_hidden + 4 * n_head + d_in)   # h/logits/exp/attn + slack
    return io + weights + interm


def _pick_tile_b(B, S, d_in, d_hidden, n_head, itemsize):
    """Largest batch tile whose footprint fits a conservative VMEM budget
    (sized with headroom for v7x's 32 MiB default scoped VMEM). If the whole
    batch fits but a half-batch tile still gives >= 512 rows per step, prefer
    grid=2 so v7x megacore can shard it (negligible cost on single-TC chips)."""
    budget = 24 * 1024 * 1024

    def ok(t):
        rows = t * S
        # lane-dense slab blocks need 8-aligned second-to-last dims unless the
        # block spans the full array (t == B).
        if t != B and ((rows % 8) or ((t * n_head) % 8)):
            return False
        return _tile_vmem_bytes(t, S, d_in, d_hidden, n_head, itemsize) <= budget

    fitting = [t for t in range(1, B + 1) if B % t == 0 and ok(t)]
    tile_b = max(fitting) if fitting else 1
    if tile_b == B and B % 2 == 0 and (B // 2) * S >= 512 and ok(B // 2):
        tile_b = B // 2
    return tile_b


def multi_head_self_attention(x, w1, w2, *, tile_b=None):
    """x: (B, S, d_in); w1: (d_in, d_hidden); w2: (d_hidden, n_head).

    Returns (output, attn) matching the PyTorch module (mask=None path):
      attn   : (B, S, n_head), softmax over the sequence dimension
      output : (B, n_head, d_in), squeezed to (B, d_in) when n_head == 1
    """
    B, S, d_in = x.shape
    d_hidden, n_head = w2.shape
    assert w1.shape == (d_in, d_hidden)

    itemsize = jnp.dtype(x.dtype).itemsize
    if tile_b is None:
        tile_b = _pick_tile_b(B, S, d_in, d_hidden, n_head, itemsize)
    assert B % tile_b == 0, "batch must be divisible by tile_b"
    grid = (B // tile_b,)

    # Free layout changes outside the kernel: lane-dense 2-D slabs everywhere.
    x2d = x.reshape(B * S, d_in)

    flops = 2 * B * S * (d_in * d_hidden + d_hidden * n_head + n_head * d_in)
    transcendentals = B * S * (d_hidden + n_head)                 # tanh + exp
    bytes_accessed = (x.size + w1.size + w2.size
                      + B * n_head * d_in + B * S * n_head) * itemsize

    cp_kwargs = dict(dimension_semantics=("parallel",))
    est = _tile_vmem_bytes(tile_b, S, d_in, d_hidden, n_head, itemsize)
    if est > 16 * 1024 * 1024:
        # leave headroom but stay under v7x's 64 MiB physical VMEM
        cp_kwargs["vmem_limit_bytes"] = max(32 * 1024 * 1024,
                                            min(56 * 1024 * 1024, 2 * est))

    kernel = functools.partial(mhsa_kernel, tile_b=tile_b, S=S, n_head=n_head)

    out2d, attn2d = pl.pallas_call(
        kernel,
        out_shape=(
            jax.ShapeDtypeStruct((B * n_head, d_in), x.dtype),
            jax.ShapeDtypeStruct((B * S, n_head), x.dtype),
        ),
        grid_spec=pltpu.PrefetchScalarGridSpec(
            num_scalar_prefetch=0,
            grid=grid,
            in_specs=[
                pl.BlockSpec((tile_b * S, d_in), lambda i: (i, 0)),       # x tile
                pl.BlockSpec((d_in, d_hidden), lambda i: (0, 0)),         # W1 (resident)
                pl.BlockSpec((d_hidden, n_head), lambda i: (0, 0)),       # W2 (resident)
            ],
            out_specs=[
                pl.BlockSpec((tile_b * n_head, d_in), lambda i: (i, 0)),  # output slab
                pl.BlockSpec((tile_b * S, n_head), lambda i: (i, 0)),     # attn slab
            ],
        ),
        compiler_params=pltpu.CompilerParams(**cp_kwargs),
        cost_estimate=pl.CostEstimate(
            flops=flops,
            transcendentals=transcendentals,
            bytes_accessed=bytes_accessed,
        ),
    )(x2d, w1, w2)

    out = out2d.reshape(B, n_head, d_in)
    attn = attn2d.reshape(B, S, n_head)
    if n_head == 1:
        out = out.squeeze(1)
    return out, attn


def xavier_uniform(key, shape, dtype=jnp.float32):
    fan_in, fan_out = shape
    bound = (6.0 / (fan_in + fan_out)) ** 0.5
    return jax.random.uniform(key, shape, dtype, -bound, bound)


if __name__ == "__main__":
    # Small shapes consistent with the module: x is [batch, seq, d_in].
    B, S, d_in, d_hidden, n_head = 4, 16, 64, 32, 4

    key = jax.random.PRNGKey(0)
    kx, k1, k2 = jax.random.split(key, 3)
    x = jax.random.normal(kx, (B, S, d_in), dtype=jnp.float32)
    w1 = xavier_uniform(k1, (d_in, d_hidden))      # == PyTorch w_1.weight.T
    w2 = xavier_uniform(k2, (d_hidden, n_head))    # == PyTorch w_2.weight.T

    out, attn = multi_head_self_attention(x, w1, w2)
    out, attn = jax.block_until_ready((out, attn))

    # Pure-JAX reference (mask=None path of the PyTorch forward).
    h = jnp.tanh(x @ w1)
    logits = h @ w2
    attn_ref = jax.nn.softmax(logits, axis=1)                 # softmax over seq dim
    out_ref = jnp.einsum('bsn,bsd->bnd', attn_ref, x)

    assert out.shape == (B, n_head, d_in)
    assert attn.shape == (B, S, n_head)
    assert jnp.allclose(attn, attn_ref, atol=1e-5, rtol=1e-5)
    assert jnp.allclose(out, out_ref, atol=1e-5, rtol=1e-5)

    print("KERNEL_OK")
</pallas_src>

<mosaic_0001>
module attributes {stable_mosaic.version = 11 : i64} {
  func.func @mhsa_kernel(%arg0: i32, %arg1: memref<64x64xf32, #tpu.memory_space<vmem>>, %arg2: memref<64x32xf32, #tpu.memory_space<vmem>>, %arg3: memref<32x4xf32, #tpu.memory_space<vmem>>, %arg4: memref<16x64xf32, #tpu.memory_space<vmem>>, %arg5: memref<64x4xf32, #tpu.memory_space<vmem>>) attributes {dimension_semantics = [#tpu.dimension_semantics<parallel>], iteration_bounds = array<i64: 1>, scalar_prefetch = 0 : i64, scratch_operands = 0 : i64, tpu.core_type = #tpu.core_type<tc>, window_params = [{transform_indices = @transform_0, window_bounds = array<i64: 64, 64>}, {pipeline_mode = #tpu.pipeline_mode<synchronous>, transform_indices = @transform_1, window_bounds = array<i64: 64, 32>}, {pipeline_mode = #tpu.pipeline_mode<synchronous>, transform_indices = @transform_2, window_bounds = array<i64: 32, 4>}, {transform_indices = @transform_3, window_bounds = array<i64: 16, 64>}, {transform_indices = @transform_4, window_bounds = array<i64: 64, 4>}]} {
    %c0 = arith.constant 0 : index
    %c0_0 = arith.constant 0 : index
    %0 = vector.load %arg1[%c0, %c0_0] : memref<64x64xf32, #tpu.memory_space<vmem>>, vector<64x64xf32>
    %c0_1 = arith.constant 0 : index
    %c0_2 = arith.constant 0 : index
    %1 = vector.load %arg2[%c0_1, %c0_2] : memref<64x32xf32, #tpu.memory_space<vmem>>, vector<64x32xf32>
    %cst = arith.constant dense<0.000000e+00> : vector<64x32xf32>
    %2 = tpu.matmul %0, %1, %cst {dimension_numbers = #tpu.dot_dimension_numbers<[1], [0], [0], [1], [0, 0, 1, 1], [], []>} : vector<64x64xf32>, vector<64x32xf32>, vector<64x32xf32> -> vector<64x32xf32>
    %3 = math.tanh %2 : vector<64x32xf32>
    %c0_3 = arith.constant 0 : index
    %c0_4 = arith.constant 0 : index
    %4 = vector.load %arg3[%c0_3, %c0_4] : memref<32x4xf32, #tpu.memory_space<vmem>>, vector<32x4xf32>
    %cst_5 = arith.constant dense<0.000000e+00> : vector<64x4xf32>
    %5 = tpu.matmul %3, %4, %cst_5 {dimension_numbers = #tpu.dot_dimension_numbers<[1], [0], [0], [1], [0, 0, 1, 1], [], []>} : vector<64x32xf32>, vector<32x4xf32>, vector<64x4xf32> -> vector<64x4xf32>
    %6 = vector.shape_cast %5 : vector<64x4xf32> to vector<4x16x4xf32>
    %cst_6 = arith.constant dense<0xFF800000> : vector<4x4xf32>
    %7 = vector.multi_reduction <maximumf>, %6, %cst_6 [1] : vector<4x16x4xf32> to vector<4x4xf32>
    %8 = vector.shape_cast %7 : vector<4x4xf32> to vector<4x1x4xf32>
    %9 = vector.broadcast %8 : vector<4x1x4xf32> to vector<4x16x4xf32>
    %10 = arith.subf %6, %9 : vector<4x16x4xf32>
    %11 = math.exp %10 : vector<4x16x4xf32>
    %cst_7 = arith.constant dense<0.000000e+00> : vector<4x4xf32>
    %12 = vector.multi_reduction <add>, %11, %cst_7 [1] : vector<4x16x4xf32> to vector<4x4xf32>
    %13 = vector.shape_cast %12 : vector<4x4xf32> to vector<4x1x4xf32>
    %14 = tpu.reciprocal %13 : vector<4x1x4xf32> -> vector<4x1x4xf32>
    %15 = vector.broadcast %14 : vector<4x1x4xf32> to vector<4x16x4xf32>
    %16 = arith.mulf %11, %15 : vector<4x16x4xf32>
    %17 = vector.shape_cast %16 : vector<4x16x4xf32> to vector<64x4xf32>
    %c0_8 = arith.constant 0 : index
    %c0_9 = arith.constant 0 : index
    %18 = vector.load %arg5[%c0_8, %c0_9] : memref<64x4xf32, #tpu.memory_space<vmem>>, vector<64x4xf32>
    tpu.vector_store %arg5[%c0_8, %c0_9], %17 {strides = array<i32>} : memref<64x4xf32, #tpu.memory_space<vmem>>, vector<64x4xf32>,
    %19 = vector.shape_cast %0 : vector<64x64xf32> to vector<4x16x64xf32>
    %cst_10 = arith.constant dense<0.000000e+00> : vector<4x4x64xf32>
    %20 = tpu.matmul %16, %19, %cst_10 {dimension_numbers = #tpu.dot_dimension_numbers<[1], [1], [2], [2], [0, 0, 0, 2, 1, 2], [0], [0]>} : vector<4x16x4xf32>, vector<4x16x64xf32>, vector<4x4x64xf32> -> vector<4x4x64xf32>
    %21 = vector.shape_cast %20 : vector<4x4x64xf32> to vector<16x64xf32>
    %c0_11 = arith.constant 0 : index
    %c0_12 = arith.constant 0 : index
    %22 = vector.load %arg4[%c0_11, %c0_12] : memref<16x64xf32, #tpu.memory_space<vmem>>, vector<16x64xf32>
    tpu.vector_store %arg4[%c0_11, %c0_12], %21 {strides = array<i32>} : memref<16x64xf32, #tpu.memory_space<vmem>>, vector<16x64xf32>,
    return
  }
  func.func @transform_0(%arg0: i32) -> (i32, i32) {
    %c0_i32 = arith.constant 0 : i32
    %c0_i32_0 = arith.constant 0 : i32
    return %arg0, %c0_i32 : i32, i32
  }
  func.func @transform_1(%arg0: i32) -> (i32, i32) {
    %c0_i32 = arith.constant 0 : i32
    %c0_i32_0 = arith.constant 0 : i32
    %c0_i32_1 = arith.constant 0 : i32
    return %c0_i32, %c0_i32_0 : i32, i32
  }
  func.func @transform_2(%arg0: i32) -> (i32, i32) {
    %c0_i32 = arith.constant 0 : i32
    %c0_i32_0 = arith.constant 0 : i32
    %c0_i32_1 = arith.constant 0 : i32
    return %c0_i32, %c0_i32_0 : i32, i32
  }
  func.func @transform_3(%arg0: i32) -> (i32, i32) {
    %c0_i32 = arith.constant 0 : i32
    %c0_i32_0 = arith.constant 0 : i32
    return %arg0, %c0_i32 : i32, i32
  }
  func.func @transform_4(%arg0: i32) -> (i32, i32) {
    %c0_i32 = arith.constant 0 : i32
    %c0_i32_0 = arith.constant 0 : i32
    return %arg0, %c0_i32 : i32, i32
  }
}

</mosaic_0001>

<llo_original>
// kernel: tpu_custom_call.1
$region0: #{tpu_custom_call.1}
  #allocation0 [shape = 'u32[]', space=smem, size = 0x4, offset = 0x4, fixed_abs, tag = 'smem constant byte address 0x4 - core index']
  #allocation1 [shape = 'u32[144,128]{1,0:T(1,128)}', space=vmem, size = 0x12000, scoped, tag = 'internal scratch']
  %s0 = inlined_call_operand.vmem [shape: f32[64,64], index: 0, kind: input, shape index: {}]
  %s1 = inlined_call_operand.vmem [shape: f32[64,32], index: 1, kind: input, shape index: {}]
  %s2 = inlined_call_operand.vmem [shape: f32[32,4], index: 2, kind: input, shape index: {}]
  %s3 = inlined_call_operand.hbm [shape: f32[16,64], index: 3, kind: output, shape index: {0}]
  %s4 = inlined_call_operand.vmem [shape: f32[64,4], index: 4, kind: output, shape index: {1}]
  %5 = xla_tuple %s3, %s4
  %s6 = sld [smem:[#allocation0]]
  $region30: #{tpu_custom_call.1} parent=0
    _
  %s8 = ssub.s32 1, %s6
  %s9 = scalar_select 0, %s8, %s6
  $region1: #{tpu_custom_call.1} parent=0
    #allocation2 [shape = 'u8[8192]{0}', space=vmem, size = 0x2000, scoped, tag = 'output window, operand 0, single buffered']
    #allocation3 [shape = 's32[1]{0}', space=sflag, size = 0x4, scoped, tag = 'scoped memory for tpu_custom_call.1']
    %10 = vsyncpa [#allocation3], 0
    // Predicated region
    $region2: #{tpu_custom_call.1} parent=1 // pred_check
      _
    $region3: #{tpu_custom_call.1} parent=1 // pred_check_branch
      %12 = sbr.rel (0) target = $region5
    $region4: #{tpu_custom_call.1} parent=1 // pred_region
      _
    $region5: #{tpu_custom_call.1} parent=1 // pred_fallthru
      _
    // Predicated region
    $region6: #{tpu_custom_call.1} parent=1 // pred_check
      _
    $region7: #{tpu_custom_call.1} parent=1 // pred_check_branch
      %14 = sbr.rel (0) target = $region9
    $region8: #{tpu_custom_call.1} parent=1 // pred_region
      _
    $region9: #{tpu_custom_call.1} parent=1 // pred_fallthru
      _
    // Predicated region
    $region10: #{tpu_custom_call.1} parent=1 // pred_check
      _
    $region11: #{tpu_custom_call.1} parent=1 // pred_check_branch
      %16 = sbr.rel (0) target = $region13
    $region12: #{tpu_custom_call.1} parent=1 // pred_region
      _
    $region13: #{tpu_custom_call.1} parent=1 // pred_fallthru
      _
    %v17 = vld [vmem:[%s0] sm:$0xff]
    %v18 = vld [vmem:[%s0 + $0x8] sm:$0xff]
    %v19 = vld [vmem:[%s0 + $0x10] sm:$0xff]
    %v20 = vld [vmem:[%s0 + $0x18] sm:$0xff]
    %v21 = vld [vmem:[%s0 + $0x20] sm:$0xff]
    %v22 = vld [vmem:[%s0 + $0x28] sm:$0xff]
    %v23 = vld [vmem:[%s0 + $0x30] sm:$0xff]
    %v24 = vld [vmem:[%s0 + $0x38] sm:$0xff]
    %v25 = vld [vmem:[%s1] sm:$0xff]
    %v26 = vld [vmem:[%s1 + $0x8] sm:$0xff]
    %v27 = vld [vmem:[%s1 + $0x10] sm:$0xff]
    %v28 = vld [vmem:[%s1 + $0x18] sm:$0xff]
    %v29 = vld [vmem:[%s1 + $0x20] sm:$0xff]
    %v30 = vld [vmem:[%s1 + $0x28] sm:$0xff]
    %v31 = vld [vmem:[%s1 + $0x30] sm:$0xff]
    %v32 = vld [vmem:[%s1 + $0x38] sm:$0xff]
    %vm33 = vcmask 523264
    %v35 = vsel %vm33, %v17, 0
    %v38 = vsel %vm33, %v18, 0
    %v41 = vsel %vm33, %v19, 0
    %v44 = vsel %vm33, %v20, 0
    %v47 = vsel %vm33, %v21, 0
    %v50 = vsel %vm33, %v22, 0
    %v53 = vsel %vm33, %v23, 0
    %v56 = vsel %vm33, %v24, 0
    %58 = vmatprep.subr.mxu0 0.0
    %59 = vmatpush1.msra.mxu0 0.0
    %60 = vmatprep.subr.mxu0 0.0
    %61 = vmatpush1.msra.mxu0 0.0
    %62 = vmatprep.subr.mxu0 0.0
    %63 = vmatpush1.msra.mxu0 0.0
    %64 = vmatprep.subr.mxu0 0.0
    %65 = vmatpush1.msra.mxu0 0.0
    %66 = vmatprep.subr.mxu0 0.0
    %67 = vmatpush1.msra.mxu0 0.0
    %68 = vmatprep.subr.mxu0 0.0
    %69 = vmatpush1.msra.mxu0 0.0
    %70 = vmatprep.subr.mxu0 0.0
    %71 = vmatpush1.msra.mxu0 0.0
    %72 = vmatprep.subr.mxu0 0.0
    %73 = vmatpush1.msra.mxu0 0.0
    %74 = vmatprep.subr.mxu0 0.0
    %75 = vmatpush1.msra.mxu0 %v32
    %76 = vmatprep.subr.mxu0 0.0
    %77 = vmatpush1.msra.mxu0 %v31
    %78 = vmatprep.subr.mxu0 0.0
    %79 = vmatpush1.msra.mxu0 %v30
    %80 = vmatprep.subr.mxu0 0.0
    %81 = vmatpush1.msra.mxu0 %v29
    %82 = vmatprep.subr.mxu0 0.0
    %83 = vmatpush1.msra.mxu0 %v28
    %84 = vmatprep.subr.mxu0 0.0
    %85 = vmatpush1.msra.mxu0 %v27
    %86 = vmatprep.subr.mxu0 0.0
    %87 = vmatpush1.msra.mxu0 %v26
    %88 = vmatprep.subr.mxu0 0.0
    %89 = vmatpush1.msra.mxu0 %v25
    %90 = vmatprep.subr.mxu0 0.0
    %91 = vmatpush2.msra.mxu0 0.0
    %92 = vmatprep.subr.mxu0 0.0
    %93 = vmatpush2.msra.mxu0 0.0
    %94 = vmatprep.subr.mxu0 0.0
    %95 = vmatpush2.msra.mxu0 0.0
    %96 = vmatprep.subr.mxu0 0.0
    %97 = vmatpush2.msra.mxu0 0.0
    %98 = vmatprep.subr.mxu0 0.0
    %99 = vmatpush2.msra.mxu0 0.0
    %100 = vmatprep.subr.mxu0 0.0
    %101 = vmatpush2.msra.mxu0 0.0
    %102 = vmatprep.subr.mxu0 0.0
    %103 = vmatpush2.msra.mxu0 0.0
    %104 = vmatprep.subr.mxu0 0.0
    %105 = vmatpush2.msra.mxu0 0.0
    %106 = vmatprep.subr.mxu0 0.0
    %107 = vmatpush2.msra.mxu0 0.0
    %108 = vmatprep.subr.mxu0 0.0
    %109 = vmatpush2.msra.mxu0 0.0
    %110 = vmatprep.subr.mxu0 0.0
    %111 = vmatpush2.msra.mxu0 0.0
    %112 = vmatprep.subr.mxu0 0.0
    %113 = vmatpush2.msra.mxu0 0.0
    %114 = vmatprep.subr.mxu0 0.0
    %115 = vmatpush2.msra.mxu0 0.0
    %116 = vmatprep.subr.mxu0 0.0
    %117 = vmatpush2.msra.mxu0 0.0
    %118 = vmatprep.subr.mxu0 0.0
    %119 = vmatpush2.msra.mxu0 0.0
    %120 = vmatprep.subr.mxu0 0.0
    %121 = vmatpush2.msra.mxu0 0.0
    %122 = vmatprep.mubr.f32.mxu0 0.0
    %123 = vmatmul.mubr.f32.gmra.mxu0 %v35
    %v124 = vpop.f32.mrf.mxu0
    %v125 = vadd.f32 0.0, %v124
    %v126 = vpop.f32.mrf.mxu0
    %127 = vmatprep.mubr.f32.mxu0 0.0
    %128 = vmatmul.mubr.f32.gmra.mxu0 %v38
    %v129 = vpop.f32.mrf.mxu0
    %v130 = vadd.f32 0.0, %v129
    %v131 = vpop.f32.mrf.mxu0
    %132 = vmatprep.mubr.f32.mxu0 0.0
    %133 = vmatmul.mubr.f32.gmra.mxu0 %v41
    %v134 = vpop.f32.mrf.mxu0
    %v135 = vadd.f32 0.0, %v134
    %v136 = vpop.f32.mrf.mxu0
    %137 = vmatprep.mubr.f32.mxu0 0.0
    %138 = vmatmul.mubr.f32.gmra.mxu0 %v44
    %v139 = vpop.f32.mrf.mxu0
    %v140 = vadd.f32 0.0, %v139
    %v141 = vpop.f32.mrf.mxu0
    %142 = vmatprep.mubr.f32.mxu0 0.0
    %143 = vmatmul.mubr.f32.gmra.mxu0 %v47
    %v144 = vpop.f32.mrf.mxu0
    %v145 = vadd.f32 0.0, %v144
    %v146 = vpop.f32.mrf.mxu0
    %147 = vmatprep.mubr.f32.mxu0 0.0
    %148 = vmatmul.mubr.f32.gmra.mxu0 %v50
    %v149 = vpop.f32.mrf.mxu0
    %v150 = vadd.f32 0.0, %v149
    %v151 = vpop.f32.mrf.mxu0
    %152 = vmatprep.mubr.f32.mxu0 0.0
    %153 = vmatmul.mubr.f32.gmra.mxu0 %v53
    %v154 = vpop.f32.mrf.mxu0
    %v155 = vadd.f32 0.0, %v154
    %v156 = vpop.f32.mrf.mxu0
    %157 = vmatprep.mubr.f32.mxu0 0.0
    %158 = vmatmul.mubr.f32.gmra.mxu0 %v56
    %v159 = vpop.f32.mrf.mxu0
    %v160 = vadd.f32 0.0, %v159
    %v161 = vpop.f32.mrf.mxu0
    %162 = vdwg.mxu0
    %v163 = vtanh.pop %v125
    %v164 = vtanh.pop %v130
    %v165 = vtanh.pop %v135
    %v166 = vtanh.pop %v140
    %v167 = vtanh.pop %v145
    %v168 = vtanh.pop %v150
    %v169 = vtanh.pop %v155
    %v170 = vtanh.pop %v160
    %v171 = vld [vmem:[%s2] sm:$0xff]
    %v172 = vld [vmem:[%s2 + $0x8] sm:$0xff]
    %v173 = vld [vmem:[%s2 + $0x10] sm:$0xff]
    %v174 = vld [vmem:[%s2 + $0x18] sm:$0xff]
    %vm175 = vcmask 261120
    %v177 = vsel %vm175, %v163, 0
    %v180 = vsel %vm175, %v164, 0
    %v183 = vsel %vm175, %v165, 0
    %v186 = vsel %vm175, %v166, 0
    %v189 = vsel %vm175, %v167, 0
    %v192 = vsel %vm175, %v168, 0
    %v195 = vsel %vm175, %v169, 0
    %v198 = vsel %vm175, %v170, 0
    %200 = vmatprep.subr.mxu0 0.0
    %201 = vmatpush1.msra.mxu0 0.0
    %202 = vmatprep.subr.mxu0 0.0
    %203 = vmatpush1.msra.mxu0 0.0
    %204 = vmatprep.subr.mxu0 0.0
    %205 = vmatpush1.msra.mxu0 0.0
    %206 = vmatprep.subr.mxu0 0.0
    %207 = vmatpush1.msra.mxu0 0.0
    %208 = vmatprep.subr.mxu0 0.0
    %209 = vmatpush1.msra.mxu0 0.0
    %210 = vmatprep.subr.mxu0 0.0
    %211 = vmatpush1.msra.mxu0 0.0
    %212 = vmatprep.subr.mxu0 0.0
    %213 = vmatpush1.msra.mxu0 0.0
    %214 = vmatprep.subr.mxu0 0.0
    %215 = vmatpush1.msra.mxu0 0.0
    %216 = vmatprep.subr.mxu0 0.0
    %217 = vmatpush1.msra.mxu0 0.0
    %218 = vmatprep.subr.mxu0 0.0
    %219 = vmatpush1.msra.mxu0 0.0
    %220 = vmatprep.subr.mxu0 0.0
    %221 = vmatpush1.msra.mxu0 0.0
    %222 = vmatprep.subr.mxu0 0.0
    %223 = vmatpush1.msra.mxu0 0.0
    %224 = vmatprep.subr.mxu0 0.0
    %225 = vmatpush1.msra.mxu0 %v174
    %226 = vmatprep.subr.mxu0 0.0
    %227 = vmatpush1.msra.mxu0 %v173
    %228 = vmatprep.subr.mxu0 0.0
    %229 = vmatpush1.msra.mxu0 %v172
    %230 = vmatprep.subr.mxu0 0.0
    %231 = vmatpush1.msra.mxu0 %v171
    %232 = vmatprep.subr.mxu0 0.0
    %233 = vmatpush2.msra.mxu0 0.0
    %234 = vmatprep.subr.mxu0 0.0
    %235 = vmatpush2.msra.mxu0 0.0
    %236 = vmatprep.subr.mxu0 0.0
    %237 = vmatpush2.msra.mxu0 0.0
    %238 = vmatprep.subr.mxu0 0.0
    %239 = vmatpush2.msra.mxu0 0.0
    %240 = vmatprep.subr.mxu0 0.0
    %241 = vmatpush2.msra.mxu0 0.0
    %242 = vmatprep.subr.mxu0 0.0
    %243 = vmatpush2.msra.mxu0 0.0
    %244 = vmatprep.subr.mxu0 0.0
    %245 = vmatpush2.msra.mxu0 0.0
    %246 = vmatprep.subr.mxu0 0.0
    %247 = vmatpush2.msra.mxu0 0.0
    %248 = vmatprep.subr.mxu0 0.0
    %249 = vmatpush2.msra.mxu0 0.0
    %250 = vmatprep.subr.mxu0 0.0
    %251 = vmatpush2.msra.mxu0 0.0
    %252 = vmatprep.subr.mxu0 0.0
    %253 = vmatpush2.msra.mxu0 0.0
    %254 = vmatprep.subr.mxu0 0.0
    %255 = vmatpush2.msra.mxu0 0.0
    %256 = vmatprep.subr.mxu0 0.0
    %257 = vmatpush2.msra.mxu0 0.0
    %258 = vmatprep.subr.mxu0 0.0
    %259 = vmatpush2.msra.mxu0 0.0
    %260 = vmatprep.subr.mxu0 0.0
    %261 = vmatpush2.msra.mxu0 0.0
    %262 = vmatprep.subr.mxu0 0.0
    %263 = vmatpush2.msra.mxu0 0.0
    %264 = vmatprep.mubr.f32.mxu0 0.0
    %265 = vmatmul.mubr.f32.gmra.mxu0 %v177
    %v266 = vpop.f32.mrf.mxu0
    %v267 = vadd.f32 0.0, %v266
    %v268 = vpop.f32.mrf.mxu0
    %269 = vmatprep.mubr.f32.mxu0 0.0
    %270 = vmatmul.mubr.f32.gmra.mxu0 %v180
    %v271 = vpop.f32.mrf.mxu0
    %v272 = vadd.f32 0.0, %v271
    %v273 = vpop.f32.mrf.mxu0
    %274 = vmatprep.mubr.f32.mxu0 0.0
    %275 = vmatmul.mubr.f32.gmra.mxu0 %v183
    %v276 = vpop.f32.mrf.mxu0
    %v277 = vadd.f32 0.0, %v276
    %v278 = vpop.f32.mrf.mxu0
    %279 = vmatprep.mubr.f32.mxu0 0.0
    %280 = vmatmul.mubr.f32.gmra.mxu0 %v186
    %v281 = vpop.f32.mrf.mxu0
    %v282 = vadd.f32 0.0, %v281
    %v283 = vpop.f32.mrf.mxu0
    %284 = vmatprep.mubr.f32.mxu0 0.0
    %285 = vmatmul.mubr.f32.gmra.mxu0 %v189
    %v286 = vpop.f32.mrf.mxu0
    %v287 = vadd.f32 0.0, %v286
    %v288 = vpop.f32.mrf.mxu0
    %289 = vmatprep.mubr.f32.mxu0 0.0
    %290 = vmatmul.mubr.f32.gmra.mxu0 %v192
    %v291 = vpop.f32.mrf.mxu0
    %v292 = vadd.f32 0.0, %v291
    %v293 = vpop.f32.mrf.mxu0
    %294 = vmatprep.mubr.f32.mxu0 0.0
    %295 = vmatmul.mubr.f32.gmra.mxu0 %v195
    %v296 = vpop.f32.mrf.mxu0
    %v297 = vadd.f32 0.0, %v296
    %v298 = vpop.f32.mrf.mxu0
    %299 = vmatprep.mubr.f32.mxu0 0.0
    %300 = vmatmul.mubr.f32.gmra.mxu0 %v198
    %v301 = vpop.f32.mrf.mxu0
    %v302 = vadd.f32 0.0, %v301
    %v303 = vpop.f32.mrf.mxu0
    %304 = vdwg.mxu0
    %vm305 = vcmask 31744
    %v306 = vsel %vm305, %v267, -inf
    %v307 = vsel %vm305, %v272, -inf
    %v308 = vmax.f32 %v306, %v307
    %v309 = vrot.slane %v308, 4
    %v310 = vmax.f32 %v308, %v309
    %v311 = vrot.slane %v310, 2
    %v312 = vmax.f32 %v310, %v311
    %v313 = vrot.slane %v312, 1
    %v314 = vmax.f32 %v312, %v313
    %v315 = vsel %vm305, %v277, -inf
    %v316 = vsel %vm305, %v282, -inf
    %v317 = vmax.f32 %v315, %v316
    %v318 = vrot.slane %v317, 4
    %v319 = vmax.f32 %v317, %v318
    %v320 = vrot.slane %v319, 2
    %v321 = vmax.f32 %v319, %v320
    %v322 = vrot.slane %v321, 1
    %v323 = vmax.f32 %v321, %v322
    %v324 = vsel %vm305, %v287, -inf
    %v325 = vsel %vm305, %v292, -inf
    %v326 = vmax.f32 %v324, %v325
    %v327 = vrot.slane %v326, 4
    %v328 = vmax.f32 %v326, %v327
    %v329 = vrot.slane %v328, 2
    %v330 = vmax.f32 %v328, %v329
    %v331 = vrot.slane %v330, 1
    %v332 = vmax.f32 %v330, %v331
    %v333 = vsel %vm305, %v297, -inf
    %v334 = vsel %vm305, %v302, -inf
    %v335 = vmax.f32 %v333, %v334
    %v336 = vrot.slane %v335, 4
    %v337 = vmax.f32 %v335, %v336
    %v338 = vrot.slane %v337, 2
    %v339 = vmax.f32 %v337, %v338
    %v340 = vrot.slane %v339, 1
    %v341 = vmax.f32 %v339, %v340
    %v342 = vsub.f32 %v267, %v314
    %v343 = vsub.f32 %v272, %v314
    %v344 = vsub.f32 %v277, %v323
    %v345 = vsub.f32 %v282, %v323
    %v346 = vsub.f32 %v287, %v332
    %v347 = vsub.f32 %v292, %v332
    %v348 = vsub.f32 %v297, %v341
    %v349 = vsub.f32 %v302, %v341
    %v350 = vmul.f32 %v342, 1.442695
    %v351 = vpow.pop %v350
    %v352 = vmul.f32 %v343, 1.442695
    %v353 = vpow.pop %v352
    %v354 = vmul.f32 %v344, 1.442695
    %v355 = vpow.pop %v354
    %v356 = vmul.f32 %v345, 1.442695
    %v357 = vpow.pop %v356
    %v358 = vmul.f32 %v346, 1.442695
    %v359 = vpow.pop %v358
    %v360 = vmul.f32 %v347, 1.442695
    %v361 = vpow.pop %v360
    %v362 = vmul.f32 %v348, 1.442695
    %v363 = vpow.pop %v362
    %v364 = vmul.f32 %v349, 1.442695
    %v365 = vpow.pop %v364
    %v366 = vsel %vm305, %v351, 0.0
    %v367 = vsel %vm305, %v353, 0.0
    %v368 = vadd.f32 %v366, %v367
    %v369 = vrot.slane %v368, 4
    %v370 = vadd.f32 %v368, %v369
    %v371 = vrot.slane %v370, 2
    %v372 = vadd.f32 %v370, %v371
    %v373 = vrot.slane %v372, 1
    %v374 = vadd.f32 %v372, %v373
    %v375 = vsel %vm305, %v355, 0.0
    %v376 = vsel %vm305, %v357, 0.0
    %v377 = vadd.f32 %v375, %v376
    %v378 = vrot.slane %v377, 4
    %v379 = vadd.f32 %v377, %v378
    %v380 = vrot.slane %v379, 2
    %v381 = vadd.f32 %v379, %v380
    %v382 = vrot.slane %v381, 1
    %v383 = vadd.f32 %v381, %v382
    %v384 = vsel %vm305, %v359, 0.0
    %v385 = vsel %vm305, %v361, 0.0
    %v386 = vadd.f32 %v384, %v385
    %v387 = vrot.slane %v386, 4
    %v388 = vadd.f32 %v386, %v387
    %v389 = vrot.slane %v388, 2
    %v390 = vadd.f32 %v388, %v389
    %v391 = vrot.slane %v390, 1
    %v392 = vadd.f32 %v390, %v391
    %v393 = vsel %vm305, %v363, 0.0
    %v394 = vsel %vm305, %v365, 0.0
    %v395 = vadd.f32 %v393, %v394
    %v396 = vrot.slane %v395, 4
    %v397 = vadd.f32 %v395, %v396
    %v398 = vrot.slane %v397, 2
    %v399 = vadd.f32 %v397, %v398
    %v400 = vrot.slane %v399, 1
    %v401 = vadd.f32 %v399, %v400
    %v402 = vrcp.pop %v374
    %v403 = vrcp.pop %v383
    %v404 = vrcp.pop %v392
    %v405 = vrcp.pop %v401
    %v406 = vmul.f32 %v351, %v402
    %v407 = vmul.f32 %v353, %v402
    %v408 = vmul.f32 %v355, %v403
    %v409 = vmul.f32 %v357, %v403
    %v410 = vmul.f32 %v359, %v404
    %v411 = vmul.f32 %v361, %v404
    %v412 = vmul.f32 %v363, %v405
    %v413 = vmul.f32 %v365, %v405
    %414 = vst.msk [vmem:[%s4] sm:$0xff] %vm305, %v406
    %415 = vst.msk [vmem:[%s4 + $0x8] sm:$0xff] %vm305, %v407
    %416 = vst.msk [vmem:[%s4 + $0x10] sm:$0xff] %vm305, %v408
    %417 = vst.msk [vmem:[%s4 + $0x18] sm:$0xff] %vm305, %v409
    %418 = vst.msk [vmem:[%s4 + $0x20] sm:$0xff] %vm305, %v410
    %419 = vst.msk [vmem:[%s4 + $0x28] sm:$0xff] %vm305, %v411
    %420 = vst.msk [vmem:[%s4 + $0x30] sm:$0xff] %vm305, %v412
    %421 = vst.msk [vmem:[%s4 + $0x38] sm:$0xff] %vm305, %v413
    %422 = vxpose.xlu0.b32.start [1/16] %v406, 128
    %423 = vxpose.xlu0.b32.cont [2/16] %v407, 128
    %424 = vxpose.xlu0.b32.cont [3/16] 0.0, 128
    %425 = vxpose.xlu0.b32.cont [4/16] 0.0, 128
    %426 = vxpose.xlu0.b32.cont [5/16] 0.0, 128
    %427 = vxpose.xlu0.b32.cont [6/16] 0.0, 128
    %428 = vxpose.xlu0.b32.cont [7/16] 0.0, 128
    %429 = vxpose.xlu0.b32.cont [8/16] 0.0, 128
    %430 = vxpose.xlu0.b32.cont [9/16] 0.0, 128
    %431 = vxpose.xlu0.b32.cont [10/16] 0.0, 128
    %432 = vxpose.xlu0.b32.cont [11/16] 0.0, 128
    %433 = vxpose.xlu0.b32.cont [12/16] 0.0, 128
    %434 = vxpose.xlu0.b32.cont [13/16] 0.0, 128
    %435 = vxpose.xlu0.b32.cont [14/16] 0.0, 128
    %436 = vxpose.xlu0.b32.cont [15/16] 0.0, 128
    %437 = vxpose.xlu0.b32.end [16/16] 0.0, 128
    %v438 = vpop.trf.xlu0
    %v439 = vpop.trf.xlu0
    %v440 = vpop.trf.xlu0
    %v441 = vpop.trf.xlu0
    %v442 = vpop.trf.xlu0
    %v443 = vpop.trf.xlu0
    %v444 = vpop.trf.xlu0
    %v445 = vpop.trf.xlu0
    %v446 = vpop.trf.xlu0
    %v447 = vpop.trf.xlu0
    %v448 = vpop.trf.xlu0
    %v449 = vpop.trf.xlu0
    %v450 = vpop.trf.xlu0
    %v451 = vpop.trf.xlu0
    %v452 = vpop.trf.xlu0
    %v453 = vpop.trf.xlu0
    %vm454 = vcmask 130048
    %v456 = vsel %vm454, %v438, 0
    %458 = vmatprep.subr.mxu0 0.0
    %459 = vmatpush1.msra.mxu0 0.0
    %460 = vmatprep.subr.mxu0 0.0
    %461 = vmatpush1.msra.mxu0 0.0
    %462 = vmatprep.subr.mxu0 0.0
    %463 = vmatpush1.msra.mxu0 0.0
    %464 = vmatprep.subr.mxu0 0.0
    %465 = vmatpush1.msra.mxu0 0.0
    %466 = vmatprep.subr.mxu0 0.0
    %467 = vmatpush1.msra.mxu0 0.0
    %468 = vmatprep.subr.mxu0 0.0
    %469 = vmatpush1.msra.mxu0 0.0
    %470 = vmatprep.subr.mxu0 0.0
    %471 = vmatpush1.msra.mxu0 0.0
    %472 = vmatprep.subr.mxu0 0.0
    %473 = vmatpush1.msra.mxu0 0.0
    %474 = vmatprep.subr.mxu0 0.0
    %475 = vmatpush1.msra.mxu0 0.0
    %476 = vmatprep.subr.mxu0 0.0
    %477 = vmatpush1.msra.mxu0 0.0
    %478 = vmatprep.subr.mxu0 0.0
    %479 = vmatpush1.msra.mxu0 0.0
    %480 = vmatprep.subr.mxu0 0.0
    %481 = vmatpush1.msra.mxu0 0.0
    %482 = vmatprep.subr.mxu0 0.0
    %483 = vmatpush1.msra.mxu0 0.0
    %484 = vmatprep.subr.mxu0 0.0
    %485 = vmatpush1.msra.mxu0 0.0
    %486 = vmatprep.subr.mxu0 0.0
    %487 = vmatpush1.msra.mxu0 %v18
    %488 = vmatprep.subr.mxu0 0.0
    %489 = vmatpush1.msra.mxu0 %v17
    %490 = vmatprep.subr.mxu0 0.0
    %491 = vmatpush2.msra.mxu0 0.0
    %492 = vmatprep.subr.mxu0 0.0
    %493 = vmatpush2.msra.mxu0 0.0
    %494 = vmatprep.subr.mxu0 0.0
    %495 = vmatpush2.msra.mxu0 0.0
    %496 = vmatprep.subr.mxu0 0.0
    %497 = vmatpush2.msra.mxu0 0.0
    %498 = vmatprep.subr.mxu0 0.0
    %499 = vmatpush2.msra.mxu0 0.0
    %500 = vmatprep.subr.mxu0 0.0
    %501 = vmatpush2.msra.mxu0 0.0
    %502 = vmatprep.subr.mxu0 0.0
    %503 = vmatpush2.msra.mxu0 0.0
    %504 = vmatprep.subr.mxu0 0.0
    %505 = vmatpush2.msra.mxu0 0.0
    %506 = vmatprep.subr.mxu0 0.0
    %507 = vmatpush2.msra.mxu0 0.0
    %508 = vmatprep.subr.mxu0 0.0
    %509 = vmatpush2.msra.mxu0 0.0
    %510 = vmatprep.subr.mxu0 0.0
    %511 = vmatpush2.msra.mxu0 0.0
    %512 = vmatprep.subr.mxu0 0.0
    %513 = vmatpush2.msra.mxu0 0.0
    %514 = vmatprep.subr.mxu0 0.0
    %515 = vmatpush2.msra.mxu0 0.0
    %516 = vmatprep.subr.mxu0 0.0
    %517 = vmatpush2.msra.mxu0 0.0
    %518 = vmatprep.subr.mxu0 0.0
    %519 = vmatpush2.msra.mxu0 0.0
    %520 = vmatprep.subr.mxu0 0.0
    %521 = vmatpush2.msra.mxu0 0.0
    %522 = vmatprep.mubr.f32.mxu0 0.0
    %523 = vmatmul.mubr.f32.gmra.mxu0 %v456
    %v524 = vpop.f32.mrf.mxu0
    %v525 = vadd.f32 0.0, %v524
    %v526 = vpop.f32.mrf.mxu0
    %527 = vdwg.mxu0
    %528 = vxpose.xlu0.b32.start [1/16] %v408, 128
    %529 = vxpose.xlu0.b32.cont [2/16] %v409, 128
    %530 = vxpose.xlu0.b32.cont [3/16] 0.0, 128
    %531 = vxpose.xlu0.b32.cont [4/16] 0.0, 128
    %532 = vxpose.xlu0.b32.cont [5/16] 0.0, 128
    %533 = vxpose.xlu0.b32.cont [6/16] 0.0, 128
    %534 = vxpose.xlu0.b32.cont [7/16] 0.0, 128
    %535 = vxpose.xlu0.b32.cont [8/16] 0.0, 128
    %536 = vxpose.xlu0.b32.cont [9/16] 0.0, 128
    %537 = vxpose.xlu0.b32.cont [10/16] 0.0, 128
    %538 = vxpose.xlu0.b32.cont [11/16] 0.0, 128
    %539 = vxpose.xlu0.b32.cont [12/16] 0.0, 128
    %540 = vxpose.xlu0.b32.cont [13/16] 0.0, 128
    %541 = vxpose.xlu0.b32.cont [14/16] 0.0, 128
    %542 = vxpose.xlu0.b32.cont [15/16] 0.0, 128
    %543 = vxpose.xlu0.b32.end [16/16] 0.0, 128
    %v544 = vpop.trf.xlu0
    %v545 = vpop.trf.xlu0
    %v546 = vpop.trf.xlu0
    %v547 = vpop.trf.xlu0
    %v548 = vpop.trf.xlu0
    %v549 = vpop.trf.xlu0
    %v550 = vpop.trf.xlu0
    %v551 = vpop.trf.xlu0
    %v552 = vpop.trf.xlu0
    %v553 = vpop.trf.xlu0
    %v554 = vpop.trf.xlu0
    %v555 = vpop.trf.xlu0
    %v556 = vpop.trf.xlu0
    %v557 = vpop.trf.xlu0
    %v558 = vpop.trf.xlu0
    %v559 = vpop.trf.xlu0
    %v561 = vsel %vm454, %v544, 0
    %563 = vmatprep.subr.mxu0 0.0
    %564 = vmatpush1.msra.mxu0 0.0
    %565 = vmatprep.subr.mxu0 0.0
    %566 = vmatpush1.msra.mxu0 0.0
    %567 = vmatprep.subr.mxu0 0.0
    %568 = vmatpush1.msra.mxu0 0.0
    %569 = vmatprep.subr.mxu0 0.0
    %570 = vmatpush1.msra.mxu0 0.0
    %571 = vmatprep.subr.mxu0 0.0
    %572 = vmatpush1.msra.mxu0 0.0
    %573 = vmatprep.subr.mxu0 0.0
    %574 = vmatpush1.msra.mxu0 0.0
    %575 = vmatprep.subr.mxu0 0.0
    %576 = vmatpush1.msra.mxu0 0.0
    %577 = vmatprep.subr.mxu0 0.0
    %578 = vmatpush1.msra.mxu0 0.0
    %579 = vmatprep.subr.mxu0 0.0
    %580 = vmatpush1.msra.mxu0 0.0
    %581 = vmatprep.subr.mxu0 0.0
    %582 = vmatpush1.msra.mxu0 0.0
    %583 = vmatprep.subr.mxu0 0.0
    %584 = vmatpush1.msra.mxu0 0.0
    %585 = vmatprep.subr.mxu0 0.0
    %586 = vmatpush1.msra.mxu0 0.0
    %587 = vmatprep.subr.mxu0 0.0
    %588 = vmatpush1.msra.mxu0 0.0
    %589 = vmatprep.subr.mxu0 0.0
    %590 = vmatpush1.msra.mxu0 0.0
    %591 = vmatprep.subr.mxu0 0.0
    %592 = vmatpush1.msra.mxu0 %v20
    %593 = vmatprep.subr.mxu0 0.0
    %594 = vmatpush1.msra.mxu0 %v19
    %595 = vmatprep.subr.mxu0 0.0
    %596 = vmatpush2.msra.mxu0 0.0
    %597 = vmatprep.subr.mxu0 0.0
    %598 = vmatpush2.msra.mxu0 0.0
    %599 = vmatprep.subr.mxu0 0.0
    %600 = vmatpush2.msra.mxu0 0.0
    %601 = vmatprep.subr.mxu0 0.0
    %602 = vmatpush2.msra.mxu0 0.0
    %603 = vmatprep.subr.mxu0 0.0
    %604 = vmatpush2.msra.mxu0 0.0
    %605 = vmatprep.subr.mxu0 0.0
    %606 = vmatpush2.msra.mxu0 0.0
    %607 = vmatprep.subr.mxu0 0.0
    %608 = vmatpush2.msra.mxu0 0.0
    %609 = vmatprep.subr.mxu0 0.0
    %610 = vmatpush2.msra.mxu0 0.0
    %611 = vmatprep.subr.mxu0 0.0
    %612 = vmatpush2.msra.mxu0 0.0
    %613 = vmatprep.subr.mxu0 0.0
    %614 = vmatpush2.msra.mxu0 0.0
    %615 = vmatprep.subr.mxu0 0.0
    %616 = vmatpush2.msra.mxu0 0.0
    %617 = vmatprep.subr.mxu0 0.0
    %618 = vmatpush2.msra.mxu0 0.0
    %619 = vmatprep.subr.mxu0 0.0
    %620 = vmatpush2.msra.mxu0 0.0
    %621 = vmatprep.subr.mxu0 0.0
    %622 = vmatpush2.msra.mxu0 0.0
    %623 = vmatprep.subr.mxu0 0.0
    %624 = vmatpush2.msra.mxu0 0.0
    %625 = vmatprep.subr.mxu0 0.0
    %626 = vmatpush2.msra.mxu0 0.0
    %627 = vmatprep.mubr.f32.mxu0 0.0
    %628 = vmatmul.mubr.f32.gmra.mxu0 %v561
    %v629 = vpop.f32.mrf.mxu0
    %v630 = vadd.f32 0.0, %v629
    %v631 = vpop.f32.mrf.mxu0
    %632 = vdwg.mxu0
    %633 = vxpose.xlu0.b32.start [1/16] %v410, 128
    %634 = vxpose.xlu0.b32.cont [2/16] %v411, 128
    %635 = vxpose.xlu0.b32.cont [3/16] 0.0, 128
    %636 = vxpose.xlu0.b32.cont [4/16] 0.0, 128
    %637 = vxpose.xlu0.b32.cont [5/16] 0.0, 128
    %638 = vxpose.xlu0.b32.cont [6/16] 0.0, 128
    %639 = vxpose.xlu0.b32.cont [7/16] 0.0, 128
    %640 = vxpose.xlu0.b32.cont [8/16] 0.0, 128
    %641 = vxpose.xlu0.b32.cont [9/16] 0.0, 128
    %642 = vxpose.xlu0.b32.cont [10/16] 0.0, 128
    %643 = vxpose.xlu0.b32.cont [11/16] 0.0, 128
    %644 = vxpose.xlu0.b32.cont [12/16] 0.0, 128
    %645 = vxpose.xlu0.b32.cont [13/16] 0.0, 128
    %646 = vxpose.xlu0.b32.cont [14/16] 0.0, 128
    %647 = vxpose.xlu0.b32.cont [15/16] 0.0, 128
    %648 = vxpose.xlu0.b32.end [16/16] 0.0, 128
    %v649 = vpop.trf.xlu0
    %v650 = vpop.trf.xlu0
    %v651 = vpop.trf.xlu0
    %v652 = vpop.trf.xlu0
    %v653 = vpop.trf.xlu0
    %v654 = vpop.trf.xlu0
    %v655 = vpop.trf.xlu0
    %v656 = vpop.trf.xlu0
    %v657 = vpop.trf.xlu0
    %v658 = vpop.trf.xlu0
    %v659 = vpop.trf.xlu0
    %v660 = vpop.trf.xlu0
    %v661 = vpop.trf.xlu0
    %v662 = vpop.trf.xlu0
    %v663 = vpop.trf.xlu0
    %v664 = vpop.trf.xlu0
    %v666 = vsel %vm454, %v649, 0
    %668 = vmatprep.subr.mxu0 0.0
    %669 = vmatpush1.msra.mxu0 0.0
    %670 = vmatprep.subr.mxu0 0.0
    %671 = vmatpush1.msra.mxu0 0.0
    %672 = vmatprep.subr.mxu0 0.0
    %673 = vmatpush1.msra.mxu0 0.0
    %674 = vmatprep.subr.mxu0 0.0
    %675 = vmatpush1.msra.mxu0 0.0
    %676 = vmatprep.subr.mxu0 0.0
    %677 = vmatpush1.msra.mxu0 0.0
    %678 = vmatprep.subr.mxu0 0.0
    %679 = vmatpush1.msra.mxu0 0.0
    %680 = vmatprep.subr.mxu0 0.0
    %681 = vmatpush1.msra.mxu0 0.0
    %682 = vmatprep.subr.mxu0 0.0
    %683 = vmatpush1.msra.mxu0 0.0
    %684 = vmatprep.subr.mxu0 0.0
    %685 = vmatpush1.msra.mxu0 0.0
    %686 = vmatprep.subr.mxu0 0.0
    %687 = vmatpush1.msra.mxu0 0.0
    %688 = vmatprep.subr.mxu0 0.0
    %689 = vmatpush1.msra.mxu0 0.0
    %690 = vmatprep.subr.mxu0 0.0
    %691 = vmatpush1.msra.mxu0 0.0
    %692 = vmatprep.subr.mxu0 0.0
    %693 = vmatpush1.msra.mxu0 0.0
    %694 = vmatprep.subr.mxu0 0.0
    %695 = vmatpush1.msra.mxu0 0.0
    %696 = vmatprep.subr.mxu0 0.0
    %697 = vmatpush1.msra.mxu0 %v22
    %698 = vmatprep.subr.mxu0 0.0
    %699 = vmatpush1.msra.mxu0 %v21
    %700 = vmatprep.subr.mxu0 0.0
    %701 = vmatpush2.msra.mxu0 0.0
    %702 = vmatprep.subr.mxu0 0.0
    %703 = vmatpush2.msra.mxu0 0.0
    %704 = vmatprep.subr.mxu0 0.0
    %705 = vmatpush2.msra.mxu0 0.0
    %706 = vmatprep.subr.mxu0 0.0
    %707 = vmatpush2.msra.mxu0 0.0
    %708 = vmatprep.subr.mxu0 0.0
    %709 = vmatpush2.msra.mxu0 0.0
    %710 = vmatprep.subr.mxu0 0.0
    %711 = vmatpush2.msra.mxu0 0.0
    %712 = vmatprep.subr.mxu0 0.0
    %713 = vmatpush2.msra.mxu0 0.0
    %714 = vmatprep.subr.mxu0 0.0
    %715 = vmatpush2.msra.mxu0 0.0
    %716 = vmatprep.subr.mxu0 0.0
    %717 = vmatpush2.msra.mxu0 0.0
    %718 = vmatprep.subr.mxu0 0.0
    %719 = vmatpush2.msra.mxu0 0.0
    %720 = vmatprep.subr.mxu0 0.0
    %721 = vmatpush2.msra.mxu0 0.0
    %722 = vmatprep.subr.mxu0 0.0
    %723 = vmatpush2.msra.mxu0 0.0
    %724 = vmatprep.subr.mxu0 0.0
    %725 = vmatpush2.msra.mxu0 0.0
    %726 = vmatprep.subr.mxu0 0.0
    %727 = vmatpush2.msra.mxu0 0.0
    %728 = vmatprep.subr.mxu0 0.0
    %729 = vmatpush2.msra.mxu0 0.0
    %730 = vmatprep.subr.mxu0 0.0
    %731 = vmatpush2.msra.mxu0 0.0
    %732 = vmatprep.mubr.f32.mxu0 0.0
    %733 = vmatmul.mubr.f32.gmra.mxu0 %v666
    %v734 = vpop.f32.mrf.mxu0
    %v735 = vadd.f32 0.0, %v734
    %v736 = vpop.f32.mrf.mxu0
    %737 = vdwg.mxu0
    %738 = vxpose.xlu0.b32.start [1/16] %v412, 128
    %739 = vxpose.xlu0.b32.cont [2/16] %v413, 128
    %740 = vxpose.xlu0.b32.cont [3/16] 0.0, 128
    %741 = vxpose.xlu0.b32.cont [4/16] 0.0, 128
    %742 = vxpose.xlu0.b32.cont [5/16] 0.0, 128
    %743 = vxpose.xlu0.b32.cont [6/16] 0.0, 128
    %744 = vxpose.xlu0.b32.cont [7/16] 0.0, 128
    %745 = vxpose.xlu0.b32.cont [8/16] 0.0, 128
    %746 = vxpose.xlu0.b32.cont [9/16] 0.0, 128
    %747 = vxpose.xlu0.b32.cont [10/16] 0.0, 128
    %748 = vxpose.xlu0.b32.cont [11/16] 0.0, 128
    %749 = vxpose.xlu0.b32.cont [12/16] 0.0, 128
    %750 = vxpose.xlu0.b32.cont [13/16] 0.0, 128
    %751 = vxpose.xlu0.b32.cont [14/16] 0.0, 128
    %752 = vxpose.xlu0.b32.cont [15/16] 0.0, 128
    %753 = vxpose.xlu0.b32.end [16/16] 0.0, 128
    %v754 = vpop.trf.xlu0
    %v755 = vpop.trf.xlu0
    %v756 = vpop.trf.xlu0
    %v757 = vpop.trf.xlu0
    %v758 = vpop.trf.xlu0
    %v759 = vpop.trf.xlu0
    %v760 = vpop.trf.xlu0
    %v761 = vpop.trf.xlu0
    %v762 = vpop.trf.xlu0
    %v763 = vpop.trf.xlu0
    %v764 = vpop.trf.xlu0
    %v765 = vpop.trf.xlu0
    %v766 = vpop.trf.xlu0
    %v767 = vpop.trf.xlu0
    %v768 = vpop.trf.xlu0
    %v769 = vpop.trf.xlu0
    %v771 = vsel %vm454, %v754, 0
    %773 = vmatprep.subr.mxu0 0.0
    %774 = vmatpush1.msra.mxu0 0.0
    %775 = vmatprep.subr.mxu0 0.0
    %776 = vmatpush1.msra.mxu0 0.0
    %777 = vmatprep.subr.mxu0 0.0
    %778 = vmatpush1.msra.mxu0 0.0
    %779 = vmatprep.subr.mxu0 0.0
    %780 = vmatpush1.msra.mxu0 0.0
    %781 = vmatprep.subr.mxu0 0.0
    %782 = vmatpush1.msra.mxu0 0.0
    %783 = vmatprep.subr.mxu0 0.0
    %784 = vmatpush1.msra.mxu0 0.0
    %785 = vmatprep.subr.mxu0 0.0
    %786 = vmatpush1.msra.mxu0 0.0
    %787 = vmatprep.subr.mxu0 0.0
    %788 = vmatpush1.msra.mxu0 0.0
    %789 = vmatprep.subr.mxu0 0.0
    %790 = vmatpush1.msra.mxu0 0.0
    %791 = vmatprep.subr.mxu0 0.0
    %792 = vmatpush1.msra.mxu0 0.0
    %793 = vmatprep.subr.mxu0 0.0
    %794 = vmatpush1.msra.mxu0 0.0
    %795 = vmatprep.subr.mxu0 0.0
    %796 = vmatpush1.msra.mxu0 0.0
    %797 = vmatprep.subr.mxu0 0.0
    %798 = vmatpush1.msra.mxu0 0.0
    %799 = vmatprep.subr.mxu0 0.0
    %800 = vmatpush1.msra.mxu0 0.0
    %801 = vmatprep.subr.mxu0 0.0
    %802 = vmatpush1.msra.mxu0 %v24
    %803 = vmatprep.subr.mxu0 0.0
    %804 = vmatpush1.msra.mxu0 %v23
    %805 = vmatprep.subr.mxu0 0.0
    %806 = vmatpush2.msra.mxu0 0.0
    %807 = vmatprep.subr.mxu0 0.0
    %808 = vmatpush2.msra.mxu0 0.0
    %809 = vmatprep.subr.mxu0 0.0
    %810 = vmatpush2.msra.mxu0 0.0
    %811 = vmatprep.subr.mxu0 0.0
    %812 = vmatpush2.msra.mxu0 0.0
    %813 = vmatprep.subr.mxu0 0.0
    %814 = vmatpush2.msra.mxu0 0.0
    %815 = vmatprep.subr.mxu0 0.0
    %816 = vmatpush2.msra.mxu0 0.0
    %817 = vmatprep.subr.mxu0 0.0
    %818 = vmatpush2.msra.mxu0 0.0
    %819 = vmatprep.subr.mxu0 0.0
    %820 = vmatpush2.msra.mxu0 0.0
    %821 = vmatprep.subr.mxu0 0.0
    %822 = vmatpush2.msra.mxu0 0.0
    %823 = vmatprep.subr.mxu0 0.0
    %824 = vmatpush2.msra.mxu0 0.0
    %825 = vmatprep.subr.mxu0 0.0
    %826 = vmatpush2.msra.mxu0 0.0
    %827 = vmatprep.subr.mxu0 0.0
    %828 = vmatpush2.msra.mxu0 0.0
    %829 = vmatprep.subr.mxu0 0.0
    %830 = vmatpush2.msra.mxu0 0.0
    %831 = vmatprep.subr.mxu0 0.0
    %832 = vmatpush2.msra.mxu0 0.0
    %833 = vmatprep.subr.mxu0 0.0
    %834 = vmatpush2.msra.mxu0 0.0
    %835 = vmatprep.subr.mxu0 0.0
    %836 = vmatpush2.msra.mxu0 0.0
    %837 = vmatprep.mubr.f32.mxu0 0.0
    %838 = vmatmul.mubr.f32.gmra.mxu0 %v771
    %v839 = vpop.f32.mrf.mxu0
    %v840 = vadd.f32 0.0, %v839
    %v841 = vpop.f32.mrf.mxu0
    %842 = vdwg.mxu0
    %v847 = vcombine.low %v525, %v630
    %v848 = vcombine.low %v735, %v840
    %851 = vst.msk [vmem:[#allocation2] sm:$0xff] %vm33, %v847
    %852 = vst.msk [vmem:[#allocation2 + $0x8] sm:$0xff] %vm33, %v848
    // Predicated region
    $region14: #{tpu_custom_call.1} parent=1 // pred_check
      _
    $region15: #{tpu_custom_call.1} parent=1 // pred_check_branch
      %854 = sbr.rel (0) target = $region17
    $region16: #{tpu_custom_call.1} parent=1 // pred_region
      %s856 = ssub.s32 256, 256
      %857 = vsyncadd [#allocation3], %s856
      %s858 = sshll.u32 [#allocation2], 4
      %s859 = int_to_ptr.vmem [resolvable:$true] %s858
      %864 = dma.vmem_to_hbm [thread:$0]  %s859, 256, %s3, [#allocation3], 128, 128, 8
    $region17: #{tpu_custom_call.1} parent=1 // pred_fallthru
      _
    // Predicated region
    $region18: #{tpu_custom_call.1} parent=1 // pred_check
      _
    $region19: #{tpu_custom_call.1} parent=1 // pred_check_branch
      %866 = sbr.rel (0) target = $region21
    $region20: #{tpu_custom_call.1} parent=1 // pred_region
      _
    $region21: #{tpu_custom_call.1} parent=1 // pred_fallthru
      _
    // Predicated region
    $region22: #{tpu_custom_call.1} parent=1 // pred_check
      _
    $region23: #{tpu_custom_call.1} parent=1 // pred_check_branch
      %868 = sbr.rel (0) target = $region25
    $region24: #{tpu_custom_call.1} parent=1 // pred_region
      %869 = dma.done [#allocation3], 256
    $region25: #{tpu_custom_call.1} parent=1 // pred_fallthru
      _
    // Predicated region
    $region26: #{tpu_custom_call.1} parent=1 // pred_check
      _
    $region27: #{tpu_custom_call.1} parent=1 // pred_check_branch
      %871 = sbr.rel (0) target = $region29
    $region28: #{tpu_custom_call.1} parent=1 // pred_region
      _
    $region29: #{tpu_custom_call.1} parent=1 // pred_fallthru
      _
    %872 = vsyncpa [#allocation3], 1

</llo_original>
